<compile_context>
chip_gen: v5e
topology: v5e:2x2
jax: 0.10.0
libtpu: 0.0.40
codegen_flags: <defaults>
</compile_context>

<pallas_src>
import jax
import jax.numpy as jnp
from jax.experimental import pallas as pl
from jax.experimental.pallas import tpu as pltpu


def _round_up(x, m):
    return (x + m - 1) // m * m


def _cdiv(a, b):
    return (a + b - 1) // b


def _choose_tm(tm, M):
    """Row-tile size: multiple of 8, and prefer an even tile count >= 2 (v7x megacore)."""
    TM = _round_up(max(8, min(tm, M)), 8)
    n = _cdiv(M, TM)
    if n == 1 and M > 8:
        TM = _round_up(_cdiv(M, 2), 8)          # split so both TCs get work
    elif n > 1 and n % 2 == 1:
        TM = _round_up(_cdiv(M, n + 1), 8)      # bump to an even tile count
    return TM


def _patch_embed_kernel(x_ref, w_ref, b_ref, o_ref):
    # x_ref: (TM, K) bf16, w_ref: (K, E_pad) bf16, b_ref: (1, E_pad) f32,
    # o_ref: (TM, E_pad) out_dtype.  f32 MXU accumulation, f32 bias add, one cast.
    acc = jnp.dot(x_ref[...], w_ref[...], preferred_element_type=jnp.float32)
    o_ref[...] = (acc + b_ref[...]).astype(o_ref.dtype)


def patch_embedding_forward(x, weight, bias, patch_size, *,
                            tm=1024,                      # v6e default; use <=512 on v5e
                            compute_dtype=jnp.bfloat16,
                            out_dtype=jnp.bfloat16):
    """x: (B, C, L); weight: (E, C, ps); bias: (E,). Returns (B, L//ps, E) in out_dtype.

    Note: operands are cast to `compute_dtype` (bf16) and the result is emitted in
    `out_dtype`; pass out_dtype=jnp.float32 for a full-precision output buffer
    (operand rounding still differs from a pure-f32 Conv1d at the ~1e-2 level).
    """
    B, C, L = x.shape
    E = weight.shape[0]
    ps = patch_size
    assert L % ps == 0, "length must be divisible by patch_size"
    P = L // ps
    M = B * P
    K = C * ps

    E_pad = _round_up(E, 128)                    # lane-dense output slab
    TM = _choose_tm(tm, M)
    num_tiles = _cdiv(M, TM)

    # --- glue (fused by XLA with the bf16 downcast): non-overlapping patches in
    # (c, k) order to match Conv1d's weight flattening.  No K padding in HBM. ---
    patches = (x.astype(compute_dtype)
                .reshape(B, C, P, ps)
                .transpose(0, 2, 1, 3)
                .reshape(M, K))

    w_flat = weight.reshape(E, K).T.astype(compute_dtype)            # (K, E)
    if E_pad != E:
        w_flat = jnp.pad(w_flat, ((0, 0), (0, E_pad - E)))
    b_row = jnp.pad(bias.astype(jnp.float32), (0, E_pad - E)).reshape(1, E_pad)

    in_bytes = jnp.dtype(compute_dtype).itemsize
    out_bytes = jnp.dtype(out_dtype).itemsize
    flops = 2 * M * K * E_pad
    bytes_accessed = (M * K * in_bytes + K * E_pad * in_bytes
                      + E_pad * 4 + M * E_pad * out_bytes)

    # Pallas allocates 2 pipeline buffers per spec even for constant index_maps.
    vmem_need = (2 * TM * K * in_bytes            # x row tiles
                 + 2 * TM * E_pad * out_bytes     # output tiles
                 + 2 * K * E_pad * in_bytes       # weight (resident, still 2 bufs)
                 + 2 * E_pad * 4)                 # bias
    vmem_limit = int(min(max(vmem_need + vmem_need // 2, 1 << 20), 48 << 20))

    out = pl.pallas_call(
        _patch_embed_kernel,
        out_shape=jax.ShapeDtypeStruct((M, E_pad), out_dtype),
        grid_spec=pltpu.PrefetchScalarGridSpec(
            num_scalar_prefetch=0,
            grid=(num_tiles,),
            in_specs=[
                pl.BlockSpec((TM, K), lambda i: (i, 0)),        # row tile of patches
                pl.BlockSpec((K, E_pad), lambda i: (0, 0)),     # weight, resident
                pl.BlockSpec((1, E_pad), lambda i: (0, 0)),     # bias, resident
            ],
            out_specs=pl.BlockSpec((TM, E_pad), lambda i: (i, 0)),
        ),
        compiler_params=pltpu.CompilerParams(
            dimension_semantics=("parallel",),
            vmem_limit_bytes=vmem_limit,
        ),
        cost_estimate=pl.CostEstimate(
            flops=flops, transcendentals=0, bytes_accessed=bytes_accessed),
    )(patches, w_flat, b_row)

    # Drop E padding only if it exists (no-op / no extra HBM pass when E % 128 == 0).
    if E_pad != E:
        out = out[:, :E]
    return out.reshape(B, P, E)


if __name__ == "__main__":
    # Small shapes consistent with the module (scaled down from 129/8/768),
    # chosen so the grid has several row tiles (exercises pipelining / megacore path).
    B, C, L = 2, 4, 256          # batch, in_channels, sequence length
    patch_size = 8
    E = 32                       # emb_size
    P = L // patch_size

    key = jax.random.PRNGKey(0)
    kx, kw, kb = jax.random.split(key, 3)

    x = jax.random.normal(kx, (B, C, L), dtype=jnp.float32)
    # Deterministic parameter init (synthetic; mimics Conv1d param shapes).
    fan_in = C * patch_size
    bound = 1.0 / (fan_in ** 0.5)
    weight = jax.random.uniform(kw, (E, C, patch_size), dtype=jnp.float32,
                                minval=-bound, maxval=bound)
    bias = jax.random.uniform(kb, (E,), dtype=jnp.float32,
                              minval=-bound, maxval=bound)

    out = patch_embedding_forward(x, weight, bias, patch_size, tm=16)
    out = jax.block_until_ready(out)

    # Reference: same math in plain JAX f32 (Conv1d with stride == kernel_size).
    patches_ref = x.reshape(B, C, P, patch_size).transpose(0, 2, 1, 3).reshape(B, P, -1)
    ref = jnp.einsum("bpk,ek->bpe", patches_ref, weight.reshape(E, -1),
                     precision="highest") + bias[None, None, :]

    assert out.shape == (B, P, E), out.shape
    assert out.dtype == jnp.bfloat16, out.dtype
    # Tolerance accounts for bf16 operands and bf16 output rounding (f32 accumulation).
    assert jnp.allclose(out.astype(jnp.float32), ref, atol=5e-2, rtol=5e-2), \
        "mismatch vs reference"
    print("KERNEL_OK")
</pallas_src>

<mosaic_0001>
module attributes {stable_mosaic.version = 11 : i64} {
  func.func @_patch_embed_kernel(%arg0: i32, %arg1: memref<16x32xbf16, #tpu.memory_space<vmem>>, %arg2: memref<32x128xbf16, #tpu.memory_space<vmem>>, %arg3: memref<1x128xf32, #tpu.memory_space<vmem>>, %arg4: memref<16x128xbf16, #tpu.memory_space<vmem>>) attributes {dimension_semantics = [#tpu.dimension_semantics<parallel>], iteration_bounds = array<i64: 4>, scalar_prefetch = 0 : i64, scratch_operands = 0 : i64, tpu.core_type = #tpu.core_type<tc>, window_params = [{transform_indices = @transform_0, window_bounds = array<i64: 16, 32>}, {pipeline_mode = #tpu.pipeline_mode<synchronous>, transform_indices = @transform_1, window_bounds = array<i64: 32, 128>}, {pipeline_mode = #tpu.pipeline_mode<synchronous>, transform_indices = @transform_2, window_bounds = array<i64: 1, 128>}, {transform_indices = @transform_3, window_bounds = array<i64: 16, 128>}]} {
    %c0 = arith.constant 0 : index
    %c0_0 = arith.constant 0 : index
    %0 = vector.load %arg1[%c0, %c0_0] : memref<16x32xbf16, #tpu.memory_space<vmem>>, vector<16x32xbf16>
    %c0_1 = arith.constant 0 : index
    %c0_2 = arith.constant 0 : index
    %1 = vector.load %arg2[%c0_1, %c0_2] : memref<32x128xbf16, #tpu.memory_space<vmem>>, vector<32x128xbf16>
    %cst = arith.constant dense<0.000000e+00> : vector<16x128xf32>
    %2 = tpu.matmul %0, %1, %cst {dimension_numbers = #tpu.dot_dimension_numbers<[1], [0], [0], [1], [0, 0, 1, 1], [], []>} : vector<16x32xbf16>, vector<32x128xbf16>, vector<16x128xf32> -> vector<16x128xf32>
    %c0_3 = arith.constant 0 : index
    %c0_4 = arith.constant 0 : index
    %3 = vector.load %arg3[%c0_3, %c0_4] : memref<1x128xf32, #tpu.memory_space<vmem>>, vector<1x128xf32>
    %4 = vector.broadcast %3 : vector<1x128xf32> to vector<16x128xf32>
    %5 = arith.addf %2, %4 : vector<16x128xf32>
    %6 = arith.truncf %5 : vector<16x128xf32> to vector<16x128xbf16>
    %c0_5 = arith.constant 0 : index
    %c0_6 = arith.constant 0 : index
    %7 = vector.load %arg4[%c0_5, %c0_6] : memref<16x128xbf16, #tpu.memory_space<vmem>>, vector<16x128xbf16>
    tpu.vector_store %arg4[%c0_5, %c0_6], %6 {strides = array<i32>} : memref<16x128xbf16, #tpu.memory_space<vmem>>, vector<16x128xbf16>,
    return
  }
  func.func @transform_0(%arg0: i32) -> (i32, i32) {
    %c0_i32 = arith.constant 0 : i32
    %c0_i32_0 = arith.constant 0 : i32
    return %arg0, %c0_i32 : i32, i32
  }
  func.func @transform_1(%arg0: i32) -> (i32, i32) {
    %c0_i32 = arith.constant 0 : i32
    %c0_i32_0 = arith.constant 0 : i32
    %c0_i32_1 = arith.constant 0 : i32
    return %c0_i32, %c0_i32_0 : i32, i32
  }
  func.func @transform_2(%arg0: i32) -> (i32, i32) {
    %c0_i32 = arith.constant 0 : i32
    %c0_i32_0 = arith.constant 0 : i32
    %c0_i32_1 = arith.constant 0 : i32
    return %c0_i32, %c0_i32_0 : i32, i32
  }
  func.func @transform_3(%arg0: i32) -> (i32, i32) {
    %c0_i32 = arith.constant 0 : i32
    %c0_i32_0 = arith.constant 0 : i32
    return %arg0, %c0_i32 : i32, i32
  }
}

</mosaic_0001>

<llo_original>
// kernel: tpu_custom_call.1
$region0: #{tpu_custom_call.1}
  #allocation0 [shape = 'u32[]', space=smem, size = 0x4, offset = 0x4, fixed_abs, tag = 'smem constant byte address 0x4 - core index']
  #allocation1 [shape = 'u32[72,128]{1,0:T(1,128)}', space=vmem, size = 0x9000, scoped, tag = 'internal scratch']
  %s0 = inlined_call_operand.vmem [shape: bf16[64,32], index: 0, kind: input, shape index: {}]
  %s1 = inlined_call_operand.vmem [shape: bf16[32,128], index: 1, kind: input, shape index: {}]
  %s2 = inlined_call_operand.vmem [shape: f32[1,128], index: 2, kind: input, shape index: {}]
  %s3 = inlined_call_operand.hbm [shape: bf16[64,128], index: 3, kind: output, shape index: {}]
  %s4 = sld [smem:[#allocation0]]
  $region45: #{tpu_custom_call.1} parent=0
    _
  %s6 = ssub.s32 1, %s4
  %s7 = scalar_select 0, %s6, %s4
  $region1: #{tpu_custom_call.1} parent=0
    #allocation2 [shape = 'u8[8192]{0}', space=vmem, size = 0x2000, scoped, tag = 'output window, operand 0']
    #allocation3 [shape = 's32[2]{0}', space=sflag, size = 0x8, scoped, tag = 'scoped memory for tpu_custom_call.1']
    %8 = vsyncpa [#allocation3], 0
    %s9 = scalar_lea.sflag [#allocation3], 1
    %10 = vsyncpa %s9, 0
    loop: start=0, step=1, limit=6
    $region2: #{tpu_custom_call.1} parent=1 // loop_pre_header
      _
    $region3: #{tpu_custom_call.1} parent=1 // loop_header
      %s12 = sphi 0, %s16
      %p13 = scmp.ge.s32.totalorder %s12, 6
      %s22 = sphi 0, %s24
      %s25 = sphi 0, %s22
      %s26 = sphi 0, %s25
      %s42 = sphi 0, %s26
      %s46 = sphi 0, %s46
      %s48 = sphi 0, %s46
      %s49 = sphi 0, %s48
      %s63 = sphi 0, %s49
      %s67 = sphi 0, %s67
      %s69 = sphi 0, %s67
      %s70 = sphi 0, %s69
      %s84 = sphi 0, %s70
      %s90 = sphi 0, %s92
      %s93 = sphi 0, %s90
      %s94 = sphi 0, %s93
      %s110 = sphi 0, %s94
    $region4: #{tpu_custom_call.1} parent=1 // loop_header_branch
      %15 = sbr.rel (%p13) target = $region8
    $region5: #{tpu_custom_call.1} parent=1 // loop_body
      %s17 = ssub.s32 %s12, 1
      %s18 = ssub.s32 %s12, 2
      %s19 = sadd.s32 %s12, 1
      %s20 = ssub.s32 %s12, %s19
      %p21 = scmp.eq.s32.totalorder %s20, 0
      %s23 = sadd.s32 %s22, 1
      %s24 = scalar_select %p21, %s22, %s23
      %p27 = pneg %p21
      %p28 = scmp.eq.s32.totalorder %s12, 3
      %p29 = por %p27, %p28
      %p30 = scmp.ne.s32.totalorder %s22, %s25
      %p31 = scmp.eq.s32.totalorder %s12, 0
      %p32 = por %p30, %p31
      %p33 = scmp.ne.s32.totalorder %s22, %s25
      %p34 = scmp.eq.s32.totalorder %s17, 3
      %p35 = por %p33, %p34
      %p36 = scmp.ne.s32.totalorder %s25, %s26
      %p37 = scmp.eq.s32.totalorder %s17, 0
      %p38 = por %p36, %p37
      %p39 = scmp.ne.s32.totalorder %s25, %s26
      %p40 = scmp.eq.s32.totalorder %s18, 3
      %p41 = por %p39, %p40
      %p43 = scmp.ne.s32.totalorder %s26, %s42
      %p44 = scmp.eq.s32.totalorder %s18, 0
      %p45 = por %p43, %p44
      %s47 = sadd.s32 %s46, 1
      %p50 = scmp.eq.s32.totalorder %s12, 3
      %p51 = scmp.ne.s32.totalorder %s46, %s48
      %p52 = scmp.eq.s32.totalorder %s12, 0
      %p53 = por %p51, %p52
      %p54 = scmp.ne.s32.totalorder %s46, %s48
      %p55 = scmp.eq.s32.totalorder %s17, 3
      %p56 = por %p54, %p55
      %p57 = scmp.ne.s32.totalorder %s48, %s49
      %p58 = scmp.eq.s32.totalorder %s17, 0
      %p59 = por %p57, %p58
      %p60 = scmp.ne.s32.totalorder %s48, %s49
      %p61 = scmp.eq.s32.totalorder %s18, 3
      %p62 = por %p60, %p61
      %p64 = scmp.ne.s32.totalorder %s49, %s63
      %p65 = scmp.eq.s32.totalorder %s18, 0
      %p66 = por %p64, %p65
      %s68 = sadd.s32 %s67, 1
      %p71 = scmp.eq.s32.totalorder %s12, 3
      %p72 = scmp.ne.s32.totalorder %s67, %s69
      %p73 = scmp.eq.s32.totalorder %s12, 0
      %p74 = por %p72, %p73
      %p75 = scmp.ne.s32.totalorder %s67, %s69
      %p76 = scmp.eq.s32.totalorder %s17, 3
      %p77 = por %p75, %p76
      %p78 = scmp.ne.s32.totalorder %s69, %s70
      %p79 = scmp.eq.s32.totalorder %s17, 0
      %p80 = por %p78, %p79
      %p81 = scmp.ne.s32.totalorder %s69, %s70
      %p82 = scmp.eq.s32.totalorder %s18, 3
      %p83 = por %p81, %p82
      %p85 = scmp.ne.s32.totalorder %s70, %s84
      %p86 = scmp.eq.s32.totalorder %s18, 0
      %p87 = por %p85, %p86
      %s88 = ssub.s32 %s12, %s19
      %p89 = scmp.eq.s32.totalorder %s88, 0
      %s91 = sadd.s32 %s90, 1
      %s92 = scalar_select %p89, %s90, %s91
      %p95 = pneg %p89
      %p96 = scmp.eq.s32.totalorder %s12, 3
      %p97 = por %p95, %p96
      %p98 = scmp.ne.s32.totalorder %s90, %s93
      %p99 = scmp.eq.s32.totalorder %s12, 0
      %p100 = por %p98, %p99
      %p101 = scmp.ne.s32.totalorder %s90, %s93
      %p102 = scmp.eq.s32.totalorder %s17, 3
      %p103 = por %p101, %p102
      %p104 = scmp.ne.s32.totalorder %s93, %s94
      %p105 = scmp.eq.s32.totalorder %s17, 0
      %p106 = por %p104, %p105
      %p107 = scmp.ne.s32.totalorder %s93, %s94
      %p108 = scmp.eq.s32.totalorder %s18, 3
      %p109 = por %p107, %p108
      %p111 = scmp.ne.s32.totalorder %s94, %s110
      %p112 = scmp.eq.s32.totalorder %s18, 0
      %p113 = por %p111, %p112
      %p114 = scmp.le.s32.totalorder 1, %s12
      %p115 = scmp.lt.s32.totalorder %s12, 5
      %p116 = pnand %p114, %p115
      %p117 = pneg %p116
      // Predicated region
      $region9: #{tpu_custom_call.1} parent=5 // pred_check
        _
      $region10: #{tpu_custom_call.1} parent=5 // pred_check_branch
        %119 = sbr.rel (%p116) target = $region12
      $region11: #{tpu_custom_call.1} parent=5 // pred_region
        %s120 = ssub.s32 %s12, 1
        // Predicated region
        $region13: #{tpu_custom_call.1} parent=11 // pred_check
          %p121 = pneg %p59
        $region14: #{tpu_custom_call.1} parent=11 // pred_check_branch
          %123 = sbr.rel (%p121) target = $region16
        $region15: #{tpu_custom_call.1} parent=11 // pred_region
          _
        $region16: #{tpu_custom_call.1} parent=11 // pred_fallthru
          _
        // Predicated region
        $region17: #{tpu_custom_call.1} parent=11 // pred_check
          %p124 = pneg %p80
        $region18: #{tpu_custom_call.1} parent=11 // pred_check_branch
          %126 = sbr.rel (%p124) target = $region20
        $region19: #{tpu_custom_call.1} parent=11 // pred_region
          _
        $region20: #{tpu_custom_call.1} parent=11 // pred_fallthru
          _
      $region12: #{tpu_custom_call.1} parent=5 // pred_fallthru
        _
      %p127 = scmp.lt.s32.totalorder %s12, 4
      // Predicated region
      $region21: #{tpu_custom_call.1} parent=5 // pred_check
        %p128 = pneg %p127
      $region22: #{tpu_custom_call.1} parent=5 // pred_check_branch
        %130 = sbr.rel (%p128) target = $region24
      $region23: #{tpu_custom_call.1} parent=5 // pred_region
        // Predicated region
        $region25: #{tpu_custom_call.1} parent=23 // pred_check
          %p131 = pneg %p32
        $region26: #{tpu_custom_call.1} parent=23 // pred_check_branch
          %133 = sbr.rel (%p131) target = $region28
        $region27: #{tpu_custom_call.1} parent=23 // pred_region
          %s134 = smul.u32 2, %s12
          %p135 = scmp.lt.s32.totalorder %s134, 7
          %s136 = scalar_select %p135, %s134, 7
          %s137 = smul.addr %s136, 4
          %s138 = scalar_lea.vmem %s0, %s137
          %s139 = smul.u32 2, %s12
        $region28: #{tpu_custom_call.1} parent=23 // pred_fallthru
          _
      $region24: #{tpu_custom_call.1} parent=5 // pred_fallthru
        _
      %p140 = scmp.le.s32.totalorder 1, %s12
      %p141 = scmp.lt.s32.totalorder %s12, 5
      %p142 = pnand %p140, %p141
      %p143 = pneg %p142
      // Predicated region
      $region29: #{tpu_custom_call.1} parent=5 // pred_check
        _
      $region30: #{tpu_custom_call.1} parent=5 // pred_check_branch
        %145 = sbr.rel (%p142) target = $region32
      $region31: #{tpu_custom_call.1} parent=5 // pred_region
        %s146 = ssub.s32 %s12, 1
        %s147 = smul.u32 2, %s17
        %p148 = scmp.lt.s32.totalorder %s147, 7
        %s149 = scalar_select %p148, %s147, 7
        %s150 = smul.addr %s149, 4
        %s151 = scalar_lea.vmem %s0, %s150
        %p152 = pneg %p38
        %p153 = pneg %p35
        %p154 = pneg %p59
        %p155 = pneg %p56
        %p156 = pneg %p80
        %p157 = pneg %p77
        %p158 = pneg %p106
        %p159 = pneg %p103
        %s160 = sand.u32 %s93, 1
        %s161 = scalar_lea.sflag [#allocation3], %s160
        %s162 = sand.u32 %s93, 1
        %s163 = smul.addr %s162, 8
        %s164 = scalar_lea.vmem [#allocation2], %s163
        %s165 = smul.u32 2, %s17
        %p166 = scmp.lt.s32.totalorder %s165, 7
        %s167 = scalar_select %p166, %s165, 7
        %s168 = smul.addr %s167, 4
        %s169 = scalar_lea.vmem %s0, %s168
        %s170 = smul.u32 2, %s17
        %s171 = smul.u32 2, %s17
        %v173 = vld [vmem:[%s169] sm:$0xf]
        %v174 = vld [vmem:[%s169 + $0x4] sm:$0xf]
        %v175 = vld [vmem:[%s1] sm:$0xf]
        %v176 = vld [vmem:[%s1 + $0x4] sm:$0xf]
        %v177 = vld [vmem:[%s1 + $0x8] sm:$0xf]
        %v178 = vld [vmem:[%s1 + $0xc] sm:$0xf]
        %v179 = vld [vmem:[%s2] sm:$0x1]
        %v181 = vperm.slane %v179, 0
        %v185 = vunpack.c.l.b16 %v173
        %v186 = vunpack.c.l.b16 %v174
        %v187 = vpack.c.b16 %v186, %v185
        %v192 = vunpack.c.l.b16 %v175
        %v193 = vunpack.c.l.b16 %v176
        %v194 = vunpack.c.l.b16 %v177
        %v195 = vunpack.c.l.b16 %v178
        %v196 = vpack.c.b16 %v193, %v192
        %v197 = vpack.c.b16 %v195, %v194
        %vm200 = vcmask 261120
        %v202 = vsel %vm200, %v187, 0
        %204 = vmatpush.bf16.msra.mxu0 0
        %205 = vmatpush.bf16.msra.mxu0 0
        %206 = vmatpush.bf16.msra.mxu0 0
        %207 = vmatpush.bf16.msra.mxu0 0
        %208 = vmatpush.bf16.msra.mxu0 0
        %209 = vmatpush.bf16.msra.mxu0 0
        %210 = vmatpush.bf16.msra.mxu0 %v197
        %211 = vmatpush.bf16.msra.mxu0 %v196
        %212 = vmatmul.bf16.gmra.mxu0 %v202
        %v213 = vpop.f32.mrf.mxu0
        %v214 = vadd.f32 %v181, %v213
        %v215 = vpop.f32.mrf.mxu0
        %v216 = vadd.f32 %v181, %v215
        %217 = vdwg.mxu0
        %v218 = vpack.c.bf16 %v214, %v214
        %v219 = vpack.c.bf16 %v216, %v216
        %220 = vst [vmem:[%s164] sm:$0xf] %v218
        %221 = vst [vmem:[%s164 + $0x4] sm:$0xf] %v219
        %s222 = sand.u32 %s93, 1
        %s223 = scalar_lea.sflag [#allocation3], %s222
        %s224 = sand.u32 %s93, 1
        %s225 = smul.addr %s224, 8
        %s226 = scalar_lea.vmem [#allocation2], %s225
        // Predicated region
        $region33: #{tpu_custom_call.1} parent=31 // pred_check
          %p227 = pneg %p103
        $region34: #{tpu_custom_call.1} parent=31 // pred_check_branch
          %229 = sbr.rel (%p227) target = $region36
        $region35: #{tpu_custom_call.1} parent=31 // pred_region
          %s230 = smul.u32 2, %s17
          %232 = vsyncadd %s223, 0
          %s233 = smul.addr %s230, 4
          %s234 = scalar_lea.hbm %s3, %s233
          %s235 = sshll.u32 %s226, 4
          %s236 = int_to_ptr.vmem [resolvable:$true] %s235
          %s237 = sshll.u32 %s234, 4
          %s238 = int_to_ptr.hbm [resolvable:$true] %s237
          %243 = dma.vmem_to_hbm [thread:$0]  %s236, 128, %s238, %s223, 64, 64, 4
        $region36: #{tpu_custom_call.1} parent=31 // pred_fallthru
          _
      $region32: #{tpu_custom_call.1} parent=5 // pred_fallthru
        _
      %p244 = scmp.le.s32.totalorder 2, %s12
      // Predicated region
      $region37: #{tpu_custom_call.1} parent=5 // pred_check
        %p245 = pneg %p244
      $region38: #{tpu_custom_call.1} parent=5 // pred_check_branch
        %247 = sbr.rel (%p245) target = $region40
      $region39: #{tpu_custom_call.1} parent=5 // pred_region
        %s248 = ssub.s32 %s12, 2
        // Predicated region
        $region41: #{tpu_custom_call.1} parent=39 // pred_check
          %p249 = pneg %p109
        $region42: #{tpu_custom_call.1} parent=39 // pred_check_branch
          %251 = sbr.rel (%p249) target = $region44
        $region43: #{tpu_custom_call.1} parent=39 // pred_region
          %s252 = sand.u32 %s94, 1
          %s253 = scalar_lea.sflag [#allocation3], %s252
          %s254 = sand.u32 %s94, 1
          %s255 = smul.addr %s254, 8
          %s256 = scalar_lea.vmem [#allocation2], %s255
          %258 = dma.done %s253, 128
        $region44: #{tpu_custom_call.1} parent=39 // pred_fallthru
          _
      $region40: #{tpu_custom_call.1} parent=5 // pred_fallthru
        _
    $region6: #{tpu_custom_call.1} parent=1 // loop_footer
      %s16 = sadd.s32 1, %s12
    $region7: #{tpu_custom_call.1} parent=1 // loop_footer_branch
      %11 = sbr.rel target = $region3
    $region8: #{tpu_custom_call.1} parent=1 // loop_exit
      _
    %259 = vsyncpa [#allocation3], 1
    %s260 = scalar_lea.sflag [#allocation3], 1
    %261 = vsyncpa %s260, 1

</llo_original>
